<compile_context>
chip_gen: v7x
topology: tpu7x:2x2x1
jax: 0.10.0
libtpu: 0.0.40
codegen_flags: <defaults>
</compile_context>

<pallas_src>
import jax
import jax.numpy as jnp
from jax.experimental import pallas as pl
from jax.experimental.pallas import tpu as pltpu

BATCH_SIZE = 10
HIDDEN_SIZE = 64
KAPPA = 8

INPUT_SIZE = (KAPPA + 1) * 2 + 1 + BATCH_SIZE * 9   # 109
H1 = 2 * HIDDEN_SIZE                                # 128
H2 = HIDDEN_SIZE                                    # 64
OUTPUT_SIZE = BATCH_SIZE * 9                        # 90

PAD = 128          # lane-aligned width used for every layer inside the kernel
DEFAULT_TILE_B = 256


def _round_up(n, m):
    return (n + m - 1) // m * m


def _actor_kernel(x_ref, w_ref, b_ref, o_ref):
    """x_ref: (tile_b, 128)  w_ref: (3, 128, 128)  b_ref: (3, 128)  o_ref: (tile_b, 128)."""
    x = x_ref[...]
    b = b_ref[...]                                   # single (3,128) load, indexed statically
    # Layer 1: Linear(109->128) + Tanh  (padded rows of W[0] are zero)
    h1 = jnp.tanh(
        jnp.dot(x, w_ref[0], preferred_element_type=jnp.float32) + b[0]
    )
    # Layer 2: Linear(128->64) + Tanh   (padded cols of W[1]/b[1] are zero -> tanh(0)=0)
    h2 = jnp.tanh(
        jnp.dot(h1, w_ref[1], preferred_element_type=jnp.float32) + b[1]
    )
    # Layer 3: Linear(64->90)           (padded rows/cols of W[2]/b[2] are zero)
    o_ref[...] = (
        jnp.dot(h2, w_ref[2], preferred_element_type=jnp.float32) + b[2]
    ).astype(o_ref.dtype)


def pack_params(params):
    """Stack the three (in,out) weights / biases into zero-padded lane-aligned tensors."""
    w1, b1 = params["w1"], params["b1"]
    w2, b2 = params["w2"], params["b2"]
    w3, b3 = params["w3"], params["b3"]

    W = jnp.zeros((3, PAD, PAD), jnp.float32)
    W = W.at[0, :INPUT_SIZE, :H1].set(w1.astype(jnp.float32))
    W = W.at[1, :H1, :H2].set(w2.astype(jnp.float32))
    W = W.at[2, :H2, :OUTPUT_SIZE].set(w3.astype(jnp.float32))

    Bv = jnp.zeros((3, PAD), jnp.float32)
    Bv = Bv.at[0, :H1].set(b1.reshape(-1).astype(jnp.float32))
    Bv = Bv.at[1, :H2].set(b2.reshape(-1).astype(jnp.float32))
    Bv = Bv.at[2, :OUTPUT_SIZE].set(b3.reshape(-1).astype(jnp.float32))
    return W, Bv


def actor_forward(x, params, *, tile_b=DEFAULT_TILE_B):
    """x: (B, INPUT_SIZE) float32.  params: dict of w1,b1,w2,b2,w3,b3 (unpadded)."""
    B = x.shape[0]
    W, Bv = pack_params(params)

    # Pad feature axis 109 -> 128 (zeros contribute nothing to the first dot).
    x_pad = jnp.zeros((B, PAD), jnp.float32).at[:, :INPUT_SIZE].set(x.astype(jnp.float32))

    # Tile the batch: multiple of 8 sublanes; cap at tile_b, pad B up to a tile multiple.
    tb = min(tile_b, _round_up(B, 8))
    b_pad = _round_up(B, tb)
    if b_pad != B:
        x_pad = jnp.pad(x_pad, ((0, b_pad - B), (0, 0)))
    grid = (b_pad // tb,)

    out_padded = pl.pallas_call(
        _actor_kernel,
        out_shape=jax.ShapeDtypeStruct((b_pad, PAD), jnp.float32),
        grid_spec=pltpu.PrefetchScalarGridSpec(
            num_scalar_prefetch=0,
            grid=grid,
            in_specs=[
                pl.BlockSpec((tb, PAD), lambda i: (i, 0)),          # x rows stream
                pl.BlockSpec((3, PAD, PAD), lambda i: (0, 0, 0)),   # weights stay resident
                pl.BlockSpec((3, PAD), lambda i: (0, 0)),           # biases stay resident
            ],
            out_specs=pl.BlockSpec((tb, PAD), lambda i: (i, 0)),
        ),
        compiler_params=pltpu.CompilerParams(
            dimension_semantics=("parallel",),   # v7x: shard batch grid across both TCs
        ),
    )(x_pad, W, Bv)

    # Drop batch padding and the zero-padded output lanes (90 live columns).
    return out_padded[:B, :OUTPUT_SIZE]


def init_params(key):
    """Deterministic init mimicking nn.Linear default (U[-1/sqrt(fan_in), 1/sqrt(fan_in)])."""
    ks = jax.random.split(key, 6)

    def _lin(kw, kb, fan_in, fan_out):
        bound = 1.0 / jnp.sqrt(jnp.float32(fan_in))
        w = jax.random.uniform(kw, (fan_in, fan_out), jnp.float32, -bound, bound)
        b = jax.random.uniform(kb, (1, fan_out), jnp.float32, -bound, bound)
        return w, b

    w1, b1 = _lin(ks[0], ks[1], INPUT_SIZE, H1)
    w2, b2 = _lin(ks[2], ks[3], H1, H2)
    w3, b3 = _lin(ks[4], ks[5], H2, OUTPUT_SIZE)
    return {"w1": w1, "b1": b1, "w2": w2, "b2": b2, "w3": w3, "b3": b3}


def actor_reference(x, params):
    h1 = jnp.tanh(x @ params["w1"] + params["b1"])
    h2 = jnp.tanh(h1 @ params["w2"] + params["b2"])
    return h2 @ params["w3"] + params["b3"]


if __name__ == "__main__":
    key = jax.random.PRNGKey(0)
    k_param, k_x = jax.random.split(key)

    params = init_params(k_param)
    B = 4  # small example batch of states
    x = jax.random.normal(k_x, (B, INPUT_SIZE), jnp.float32)

    out = actor_forward(x, params)
    out = jax.block_until_ready(out)

    ref = actor_reference(x, params)
    assert out.shape == (B, OUTPUT_SIZE)
    assert jnp.allclose(out, ref, atol=1e-5, rtol=1e-5)

    # Also exercise the tiled / multi-grid-step path with a larger batch.
    k_big = jax.random.fold_in(k_x, 1)
    xb = jax.random.normal(k_big, (1000, INPUT_SIZE), jnp.float32)
    outb = jax.block_until_ready(actor_forward(xb, params))
    refb = actor_reference(xb, params)
    assert outb.shape == (1000, OUTPUT_SIZE)
    assert jnp.allclose(outb, refb, atol=1e-5, rtol=1e-5)

    print("KERNEL_OK")
</pallas_src>

<mosaic_0001>
module attributes {stable_mosaic.version = 11 : i64} {
  func.func @_actor_kernel(%arg0: i32, %arg1: memref<8x128xf32, #tpu.memory_space<vmem>>, %arg2: memref<3x128x128xf32, #tpu.memory_space<vmem>>, %arg3: memref<3x128xf32, #tpu.memory_space<vmem>>, %arg4: memref<8x128xf32, #tpu.memory_space<vmem>>) attributes {dimension_semantics = [#tpu.dimension_semantics<parallel>], iteration_bounds = array<i64: 1>, scalar_prefetch = 0 : i64, scratch_operands = 0 : i64, tpu.core_type = #tpu.core_type<tc>, window_params = [{transform_indices = @transform_0, window_bounds = array<i64: 8, 128>}, {pipeline_mode = #tpu.pipeline_mode<synchronous>, transform_indices = @transform_1, window_bounds = array<i64: 3, 128, 128>}, {pipeline_mode = #tpu.pipeline_mode<synchronous>, transform_indices = @transform_2, window_bounds = array<i64: 3, 128>}, {transform_indices = @transform_3, window_bounds = array<i64: 8, 128>}]} {
    %c0 = arith.constant 0 : index
    %c0_0 = arith.constant 0 : index
    %0 = vector.load %arg1[%c0, %c0_0] : memref<8x128xf32, #tpu.memory_space<vmem>>, vector<8x128xf32>
    %c0_1 = arith.constant 0 : index
    %c0_2 = arith.constant 0 : index
    %1 = vector.load %arg3[%c0_1, %c0_2] : memref<3x128xf32, #tpu.memory_space<vmem>>, vector<3x128xf32>
    %c0_3 = arith.constant 0 : index
    %c0_4 = arith.constant 0 : index
    %c0_5 = arith.constant 0 : index
    %2 = vector.load %arg2[%c0_3, %c0_4, %c0_5] : memref<3x128x128xf32, #tpu.memory_space<vmem>>, vector<1x128x128xf32>
    %3 = vector.shape_cast %2 : vector<1x128x128xf32> to vector<128x128xf32>
    %cst = arith.constant dense<0.000000e+00> : vector<8x128xf32>
    %4 = tpu.matmul %0, %3, %cst {dimension_numbers = #tpu.dot_dimension_numbers<[1], [0], [0], [1], [0, 0, 1, 1], [], []>} : vector<8x128xf32>, vector<128x128xf32>, vector<8x128xf32> -> vector<8x128xf32>
    %5 = vector.extract_strided_slice %1 {offsets = [0, 0], sizes = [1, 128], strides = [1, 1]} : vector<3x128xf32> to vector<1x128xf32>
    %6 = vector.shape_cast %5 : vector<1x128xf32> to vector<128xf32>
    %7 = vector.shape_cast %6 : vector<128xf32> to vector<1x128xf32>
    %8 = vector.broadcast %7 : vector<1x128xf32> to vector<8x128xf32>
    %9 = arith.addf %4, %8 : vector<8x128xf32>
    %10 = math.tanh %9 : vector<8x128xf32>
    %c1 = arith.constant 1 : index
    %c0_6 = arith.constant 0 : index
    %c0_7 = arith.constant 0 : index
    %11 = vector.load %arg2[%c1, %c0_6, %c0_7] : memref<3x128x128xf32, #tpu.memory_space<vmem>>, vector<1x128x128xf32>
    %12 = vector.shape_cast %11 : vector<1x128x128xf32> to vector<128x128xf32>
    %cst_8 = arith.constant dense<0.000000e+00> : vector<8x128xf32>
    %13 = tpu.matmul %10, %12, %cst_8 {dimension_numbers = #tpu.dot_dimension_numbers<[1], [0], [0], [1], [0, 0, 1, 1], [], []>} : vector<8x128xf32>, vector<128x128xf32>, vector<8x128xf32> -> vector<8x128xf32>
    %14 = vector.extract_strided_slice %1 {offsets = [1, 0], sizes = [1, 128], strides = [1, 1]} : vector<3x128xf32> to vector<1x128xf32>
    %15 = vector.shape_cast %14 : vector<1x128xf32> to vector<128xf32>
    %16 = vector.shape_cast %15 : vector<128xf32> to vector<1x128xf32>
    %17 = vector.broadcast %16 : vector<1x128xf32> to vector<8x128xf32>
    %18 = arith.addf %13, %17 : vector<8x128xf32>
    %19 = math.tanh %18 : vector<8x128xf32>
    %c2 = arith.constant 2 : index
    %c0_9 = arith.constant 0 : index
    %c0_10 = arith.constant 0 : index
    %20 = vector.load %arg2[%c2, %c0_9, %c0_10] : memref<3x128x128xf32, #tpu.memory_space<vmem>>, vector<1x128x128xf32>
    %21 = vector.shape_cast %20 : vector<1x128x128xf32> to vector<128x128xf32>
    %cst_11 = arith.constant dense<0.000000e+00> : vector<8x128xf32>
    %22 = tpu.matmul %19, %21, %cst_11 {dimension_numbers = #tpu.dot_dimension_numbers<[1], [0], [0], [1], [0, 0, 1, 1], [], []>} : vector<8x128xf32>, vector<128x128xf32>, vector<8x128xf32> -> vector<8x128xf32>
    %23 = vector.extract_strided_slice %1 {offsets = [2, 0], sizes = [1, 128], strides = [1, 1]} : vector<3x128xf32> to vector<1x128xf32>
    %24 = vector.shape_cast %23 : vector<1x128xf32> to vector<128xf32>
    %25 = vector.shape_cast %24 : vector<128xf32> to vector<1x128xf32>
    %26 = vector.broadcast %25 : vector<1x128xf32> to vector<8x128xf32>
    %27 = arith.addf %22, %26 : vector<8x128xf32>
    %c0_12 = arith.constant 0 : index
    %c0_13 = arith.constant 0 : index
    %28 = vector.load %arg4[%c0_12, %c0_13] : memref<8x128xf32, #tpu.memory_space<vmem>>, vector<8x128xf32>
    tpu.vector_store %arg4[%c0_12, %c0_13], %27 {strides = array<i32>} : memref<8x128xf32, #tpu.memory_space<vmem>>, vector<8x128xf32>,
    return
  }
  func.func @transform_0(%arg0: i32) -> (i32, i32) {
    %c0_i32 = arith.constant 0 : i32
    %c0_i32_0 = arith.constant 0 : i32
    return %arg0, %c0_i32 : i32, i32
  }
  func.func @transform_1(%arg0: i32) -> (i32, i32, i32) {
    %c0_i32 = arith.constant 0 : i32
    %c0_i32_0 = arith.constant 0 : i32
    %c0_i32_1 = arith.constant 0 : i32
    %c0_i32_2 = arith.constant 0 : i32
    return %c0_i32, %c0_i32_0, %c0_i32_1 : i32, i32, i32
  }
  func.func @transform_2(%arg0: i32) -> (i32, i32) {
    %c0_i32 = arith.constant 0 : i32
    %c0_i32_0 = arith.constant 0 : i32
    %c0_i32_1 = arith.constant 0 : i32
    return %c0_i32, %c0_i32_0 : i32, i32
  }
  func.func @transform_3(%arg0: i32) -> (i32, i32) {
    %c0_i32 = arith.constant 0 : i32
    %c0_i32_0 = arith.constant 0 : i32
    return %arg0, %c0_i32 : i32, i32
  }
}

</mosaic_0001>

<llo_original>
// kernel: tpu_custom_call.1
$region0: #{tpu_custom_call.1}
  #allocation0 [shape = 'u32[]', space=smem, size = 0x4, offset = 0x4, fixed_abs, tag = 'smem constant byte address 0x4 - core index']
  #allocation1 [shape = 'u32[144,128]{1,0:T(1,128)}', space=vmem, size = 0x12000, scoped, tag = 'internal scratch']
  %s0 = inlined_call_operand.hbm [shape: f32[8,128], index: 0, kind: input, shape index: {}]
  %s1 = inlined_call_operand.hbm [shape: f32[3,128,128], index: 1, kind: input, shape index: {}]
  %s2 = inlined_call_operand.vmem [shape: f32[3,128], index: 2, kind: input, shape index: {}]
  %s3 = inlined_call_operand.hbm [shape: f32[8,128], index: 3, kind: output, shape index: {}]
  %s4 = sld [smem:[#allocation0]]
  $region30: #{tpu_custom_call.1} parent=0
    _
  %s6 = ssub.s32 1, %s4
  %s7 = scalar_select 0, %s6, %s4
  $region1: #{tpu_custom_call.1} parent=0
    #allocation2 [shape = 'u8[4096]{0}', space=vmem, size = 0x1000, scoped, tag = 'input window, operand 0, single buffered']
    #allocation3 [shape = 's32[1]{0}', space=sflag, size = 0x4, scoped, tag = 'scoped memory for tpu_custom_call.1']
    #allocation4 [shape = 's32[1]{0}', space=sflag, size = 0x4, scoped, tag = 'scoped memory for tpu_custom_call.1']
    #allocation5 [shape = 'u8[196608]{0}', space=vmem, size = 0x30000, scoped, tag = 'input window, operand 1, single buffered']
    #allocation6 [shape = 's32[1]{0}', space=sflag, size = 0x4, scoped, tag = 'scoped memory for tpu_custom_call.1']
    #allocation7 [shape = 'u8[4096]{0}', space=vmem, size = 0x1000, scoped, tag = 'output window, operand 0, single buffered']
    %8 = vsyncpa [#allocation3], 0
    %9 = vsyncpa [#allocation6], 0
    %10 = vsyncpa [#allocation4], 0
    // Predicated region
    $region2: #{tpu_custom_call.1} parent=1 // pred_check
      _
    $region3: #{tpu_custom_call.1} parent=1 // pred_check_branch
      %12 = sbr.rel (0) target = $region5
    $region4: #{tpu_custom_call.1} parent=1 // pred_region
      %s14 = ssub.s32 128, 128
      %15 = vsyncadd [#allocation3], %s14
      %s17 = sshll.u32 [#allocation2], 4
      %s18 = int_to_ptr.vmem [resolvable:$true] %s17
      %20 = dma.hbm_to_vmem [thread:$0]  %s0, 128, %s18, [#allocation3]
    $region5: #{tpu_custom_call.1} parent=1 // pred_fallthru
      _
    // Predicated region
    $region6: #{tpu_custom_call.1} parent=1 // pred_check
      _
    $region7: #{tpu_custom_call.1} parent=1 // pred_check_branch
      %22 = sbr.rel (0) target = $region9
    $region8: #{tpu_custom_call.1} parent=1 // pred_region
      %s24 = ssub.s32 6144, 6144
      %25 = vsyncadd [#allocation6], %s24
      %s26 = sshll.u32 [#allocation5], 4
      %s27 = int_to_ptr.vmem [resolvable:$true] %s26
      %32 = dma.hbm_to_vmem [thread:$0]  %s1, 6144, %s27, [#allocation6], 128, 128, 8
    $region9: #{tpu_custom_call.1} parent=1 // pred_fallthru
      _
    // Predicated region
    $region10: #{tpu_custom_call.1} parent=1 // pred_check
      _
    $region11: #{tpu_custom_call.1} parent=1 // pred_check_branch
      %34 = sbr.rel (0) target = $region13
    $region12: #{tpu_custom_call.1} parent=1 // pred_region
      _
    $region13: #{tpu_custom_call.1} parent=1 // pred_fallthru
      _
    // Predicated region
    $region14: #{tpu_custom_call.1} parent=1 // pred_check
      _
    $region15: #{tpu_custom_call.1} parent=1 // pred_check_branch
      %36 = sbr.rel (0) target = $region17
    $region16: #{tpu_custom_call.1} parent=1 // pred_region
      %37 = dma.done [#allocation3], 128
    $region17: #{tpu_custom_call.1} parent=1 // pred_fallthru
      _
    // Predicated region
    $region18: #{tpu_custom_call.1} parent=1 // pred_check
      _
    $region19: #{tpu_custom_call.1} parent=1 // pred_check_branch
      %39 = sbr.rel (0) target = $region21
    $region20: #{tpu_custom_call.1} parent=1 // pred_region
      %40 = dma.done [#allocation6], 6144
    $region21: #{tpu_custom_call.1} parent=1 // pred_fallthru
      _
    %v41 = vld [vmem:[#allocation2] sm:$0xff]
    %v42 = vld [vmem:[%s2] sm:$0x7]
    %v43 = vld [vmem:[#allocation5] sm:$0xff]
    %v44 = vld [vmem:[#allocation5 + $0x8] sm:$0xff]
    %v45 = vld [vmem:[#allocation5 + $0x10] sm:$0xff]
    %v46 = vld [vmem:[#allocation5 + $0x18] sm:$0xff]
    %v47 = vld [vmem:[#allocation5 + $0x20] sm:$0xff]
    %v48 = vld [vmem:[#allocation5 + $0x28] sm:$0xff]
    %v49 = vld [vmem:[#allocation5 + $0x30] sm:$0xff]
    %v50 = vld [vmem:[#allocation5 + $0x38] sm:$0xff]
    %v51 = vld [vmem:[#allocation5 + $0x40] sm:$0xff]
    %v52 = vld [vmem:[#allocation5 + $0x48] sm:$0xff]
    %v53 = vld [vmem:[#allocation5 + $0x50] sm:$0xff]
    %v54 = vld [vmem:[#allocation5 + $0x58] sm:$0xff]
    %v55 = vld [vmem:[#allocation5 + $0x60] sm:$0xff]
    %v56 = vld [vmem:[#allocation5 + $0x68] sm:$0xff]
    %v57 = vld [vmem:[#allocation5 + $0x70] sm:$0xff]
    %v58 = vld [vmem:[#allocation5 + $0x78] sm:$0xff]
    %v59 = vlaneseq
    %v60 = vshrl.u32 %v59, 7
    %v61 = vsub.s32 0, %v60
    %v62 = vrot.slane %v42, %v61
    %63 = vmatprep.subr.mxu0 0.0
    %64 = vmatpush1.msra.mxu0 %v43
    %65 = vmatprep.subr.mxu0 0.0
    %66 = vmatpush1.msra.mxu0 %v44
    %67 = vmatprep.subr.mxu0 0.0
    %68 = vmatpush1.msra.mxu0 %v45
    %69 = vmatprep.subr.mxu0 0.0
    %70 = vmatpush1.msra.mxu0 %v46
    %71 = vmatprep.subr.mxu0 0.0
    %72 = vmatpush1.msra.mxu0 %v47
    %73 = vmatprep.subr.mxu0 0.0
    %74 = vmatpush1.msra.mxu0 %v48
    %75 = vmatprep.subr.mxu0 0.0
    %76 = vmatpush1.msra.mxu0 %v49
    %77 = vmatprep.subr.mxu0 0.0
    %78 = vmatpush1.msra.mxu0 %v50
    %79 = vmatprep.subr.mxu0 0.0
    %80 = vmatpush1.msra.mxu0 %v51
    %81 = vmatprep.subr.mxu0 0.0
    %82 = vmatpush1.msra.mxu0 %v52
    %83 = vmatprep.subr.mxu0 0.0
    %84 = vmatpush1.msra.mxu0 %v53
    %85 = vmatprep.subr.mxu0 0.0
    %86 = vmatpush1.msra.mxu0 %v54
    %87 = vmatprep.subr.mxu0 0.0
    %88 = vmatpush1.msra.mxu0 %v55
    %89 = vmatprep.subr.mxu0 0.0
    %90 = vmatpush1.msra.mxu0 %v56
    %91 = vmatprep.subr.mxu0 0.0
    %92 = vmatpush1.msra.mxu0 %v57
    %93 = vmatprep.subr.mxu0 0.0
    %94 = vmatpush1.msra.mxu0 %v58
    %95 = vmatprep.subr.mxu0 0.0
    %96 = vmatpush1.msra.mxu0 0.0
    %97 = vmatprep.subr.mxu0 0.0
    %98 = vmatpush1.msra.mxu0 0.0
    %99 = vmatprep.subr.mxu0 0.0
    %100 = vmatpush1.msra.mxu0 0.0
    %101 = vmatprep.subr.mxu0 0.0
    %102 = vmatpush1.msra.mxu0 0.0
    %103 = vmatprep.subr.mxu0 0.0
    %104 = vmatpush1.msra.mxu0 0.0
    %105 = vmatprep.subr.mxu0 0.0
    %106 = vmatpush1.msra.mxu0 0.0
    %107 = vmatprep.subr.mxu0 0.0
    %108 = vmatpush1.msra.mxu0 0.0
    %109 = vmatprep.subr.mxu0 0.0
    %110 = vmatpush1.msra.mxu0 0.0
    %111 = vmatprep.subr.mxu0 0.0
    %112 = vmatpush1.msra.mxu0 0.0
    %113 = vmatprep.subr.mxu0 0.0
    %114 = vmatpush1.msra.mxu0 0.0
    %115 = vmatprep.subr.mxu0 0.0
    %116 = vmatpush1.msra.mxu0 0.0
    %117 = vmatprep.subr.mxu0 0.0
    %118 = vmatpush1.msra.mxu0 0.0
    %119 = vmatprep.subr.mxu0 0.0
    %120 = vmatpush1.msra.mxu0 0.0
    %121 = vmatprep.subr.mxu0 0.0
    %122 = vmatpush1.msra.mxu0 0.0
    %123 = vmatprep.subr.mxu0 0.0
    %124 = vmatpush1.msra.mxu0 0.0
    %125 = vmatprep.subr.mxu0 0.0
    %126 = vmatpush1.msra.mxu0 0.0
    %127 = vmatprep.mubr.f32.mxu0 0.0
    %128 = vmatmul.mubr.f32.gmra.mrb[0].mxu0 %v41
    %v129 = vpop.f32.mrb[0].mxu0
    %v130 = vadd.f32 %v62, %v129
    %v131 = vpop.f32.mrb[0].mxu0
    %132 = vdwg.mxu0
    %v133 = vtanh.pop %v130
    %s134 = scalar_lea.vmem [#allocation5], 128
    %v135 = vld [vmem:[%s134] sm:$0xff]
    %v136 = vld [vmem:[%s134 + $0x8] sm:$0xff]
    %v137 = vld [vmem:[%s134 + $0x10] sm:$0xff]
    %v138 = vld [vmem:[%s134 + $0x18] sm:$0xff]
    %v139 = vld [vmem:[%s134 + $0x20] sm:$0xff]
    %v140 = vld [vmem:[%s134 + $0x28] sm:$0xff]
    %v141 = vld [vmem:[%s134 + $0x30] sm:$0xff]
    %v142 = vld [vmem:[%s134 + $0x38] sm:$0xff]
    %v143 = vld [vmem:[%s134 + $0x40] sm:$0xff]
    %v144 = vld [vmem:[%s134 + $0x48] sm:$0xff]
    %v145 = vld [vmem:[%s134 + $0x50] sm:$0xff]
    %v146 = vld [vmem:[%s134 + $0x58] sm:$0xff]
    %v147 = vld [vmem:[%s134 + $0x60] sm:$0xff]
    %v148 = vld [vmem:[%s134 + $0x68] sm:$0xff]
    %v149 = vld [vmem:[%s134 + $0x70] sm:$0xff]
    %v150 = vld [vmem:[%s134 + $0x78] sm:$0xff]
    %v151 = vlaneseq
    %v152 = vshrl.u32 %v151, 7
    %v153 = vsub.s32 1, %v152
    %v154 = vrot.slane %v42, %v153
    %155 = vmatprep.subr.mxu0 0.0
    %156 = vmatpush1.msra.mxu0 %v135
    %157 = vmatprep.subr.mxu0 0.0
    %158 = vmatpush1.msra.mxu0 %v136
    %159 = vmatprep.subr.mxu0 0.0
    %160 = vmatpush1.msra.mxu0 %v137
    %161 = vmatprep.subr.mxu0 0.0
    %162 = vmatpush1.msra.mxu0 %v138
    %163 = vmatprep.subr.mxu0 0.0
    %164 = vmatpush1.msra.mxu0 %v139
    %165 = vmatprep.subr.mxu0 0.0
    %166 = vmatpush1.msra.mxu0 %v140
    %167 = vmatprep.subr.mxu0 0.0
    %168 = vmatpush1.msra.mxu0 %v141
    %169 = vmatprep.subr.mxu0 0.0
    %170 = vmatpush1.msra.mxu0 %v142
    %171 = vmatprep.subr.mxu0 0.0
    %172 = vmatpush1.msra.mxu0 %v143
    %173 = vmatprep.subr.mxu0 0.0
    %174 = vmatpush1.msra.mxu0 %v144
    %175 = vmatprep.subr.mxu0 0.0
    %176 = vmatpush1.msra.mxu0 %v145
    %177 = vmatprep.subr.mxu0 0.0
    %178 = vmatpush1.msra.mxu0 %v146
    %179 = vmatprep.subr.mxu0 0.0
    %180 = vmatpush1.msra.mxu0 %v147
    %181 = vmatprep.subr.mxu0 0.0
    %182 = vmatpush1.msra.mxu0 %v148
    %183 = vmatprep.subr.mxu0 0.0
    %184 = vmatpush1.msra.mxu0 %v149
    %185 = vmatprep.subr.mxu0 0.0
    %186 = vmatpush1.msra.mxu0 %v150
    %187 = vmatprep.subr.mxu0 0.0
    %188 = vmatpush1.msra.mxu0 0.0
    %189 = vmatprep.subr.mxu0 0.0
    %190 = vmatpush1.msra.mxu0 0.0
    %191 = vmatprep.subr.mxu0 0.0
    %192 = vmatpush1.msra.mxu0 0.0
    %193 = vmatprep.subr.mxu0 0.0
    %194 = vmatpush1.msra.mxu0 0.0
    %195 = vmatprep.subr.mxu0 0.0
    %196 = vmatpush1.msra.mxu0 0.0
    %197 = vmatprep.subr.mxu0 0.0
    %198 = vmatpush1.msra.mxu0 0.0
    %199 = vmatprep.subr.mxu0 0.0
    %200 = vmatpush1.msra.mxu0 0.0
    %201 = vmatprep.subr.mxu0 0.0
    %202 = vmatpush1.msra.mxu0 0.0
    %203 = vmatprep.subr.mxu0 0.0
    %204 = vmatpush1.msra.mxu0 0.0
    %205 = vmatprep.subr.mxu0 0.0
    %206 = vmatpush1.msra.mxu0 0.0
    %207 = vmatprep.subr.mxu0 0.0
    %208 = vmatpush1.msra.mxu0 0.0
    %209 = vmatprep.subr.mxu0 0.0
    %210 = vmatpush1.msra.mxu0 0.0
    %211 = vmatprep.subr.mxu0 0.0
    %212 = vmatpush1.msra.mxu0 0.0
    %213 = vmatprep.subr.mxu0 0.0
    %214 = vmatpush1.msra.mxu0 0.0
    %215 = vmatprep.subr.mxu0 0.0
    %216 = vmatpush1.msra.mxu0 0.0
    %217 = vmatprep.subr.mxu0 0.0
    %218 = vmatpush1.msra.mxu0 0.0
    %219 = vmatprep.mubr.f32.mxu0 0.0
    %220 = vmatmul.mubr.f32.gmra.mrb[0].mxu0 %v133
    %v221 = vpop.f32.mrb[0].mxu0
    %v222 = vadd.f32 %v154, %v221
    %v223 = vpop.f32.mrb[0].mxu0
    %224 = vdwg.mxu0
    %v225 = vtanh.pop %v222
    %s226 = scalar_lea.vmem [#allocation5], 256
    %v227 = vld [vmem:[%s226] sm:$0xff]
    %v228 = vld [vmem:[%s226 + $0x8] sm:$0xff]
    %v229 = vld [vmem:[%s226 + $0x10] sm:$0xff]
    %v230 = vld [vmem:[%s226 + $0x18] sm:$0xff]
    %v231 = vld [vmem:[%s226 + $0x20] sm:$0xff]
    %v232 = vld [vmem:[%s226 + $0x28] sm:$0xff]
    %v233 = vld [vmem:[%s226 + $0x30] sm:$0xff]
    %v234 = vld [vmem:[%s226 + $0x38] sm:$0xff]
    %v235 = vld [vmem:[%s226 + $0x40] sm:$0xff]
    %v236 = vld [vmem:[%s226 + $0x48] sm:$0xff]
    %v237 = vld [vmem:[%s226 + $0x50] sm:$0xff]
    %v238 = vld [vmem:[%s226 + $0x58] sm:$0xff]
    %v239 = vld [vmem:[%s226 + $0x60] sm:$0xff]
    %v240 = vld [vmem:[%s226 + $0x68] sm:$0xff]
    %v241 = vld [vmem:[%s226 + $0x70] sm:$0xff]
    %v242 = vld [vmem:[%s226 + $0x78] sm:$0xff]
    %v243 = vlaneseq
    %v244 = vshrl.u32 %v243, 7
    %v245 = vsub.s32 2, %v244
    %v246 = vrot.slane %v42, %v245
    %247 = vmatprep.subr.mxu0 0.0
    %248 = vmatpush1.msra.mxu0 %v227
    %249 = vmatprep.subr.mxu0 0.0
    %250 = vmatpush1.msra.mxu0 %v228
    %251 = vmatprep.subr.mxu0 0.0
    %252 = vmatpush1.msra.mxu0 %v229
    %253 = vmatprep.subr.mxu0 0.0
    %254 = vmatpush1.msra.mxu0 %v230
    %255 = vmatprep.subr.mxu0 0.0
    %256 = vmatpush1.msra.mxu0 %v231
    %257 = vmatprep.subr.mxu0 0.0
    %258 = vmatpush1.msra.mxu0 %v232
    %259 = vmatprep.subr.mxu0 0.0
    %260 = vmatpush1.msra.mxu0 %v233
    %261 = vmatprep.subr.mxu0 0.0
    %262 = vmatpush1.msra.mxu0 %v234
    %263 = vmatprep.subr.mxu0 0.0
    %264 = vmatpush1.msra.mxu0 %v235
    %265 = vmatprep.subr.mxu0 0.0
    %266 = vmatpush1.msra.mxu0 %v236
    %267 = vmatprep.subr.mxu0 0.0
    %268 = vmatpush1.msra.mxu0 %v237
    %269 = vmatprep.subr.mxu0 0.0
    %270 = vmatpush1.msra.mxu0 %v238
    %271 = vmatprep.subr.mxu0 0.0
    %272 = vmatpush1.msra.mxu0 %v239
    %273 = vmatprep.subr.mxu0 0.0
    %274 = vmatpush1.msra.mxu0 %v240
    %275 = vmatprep.subr.mxu0 0.0
    %276 = vmatpush1.msra.mxu0 %v241
    %277 = vmatprep.subr.mxu0 0.0
    %278 = vmatpush1.msra.mxu0 %v242
    %279 = vmatprep.subr.mxu0 0.0
    %280 = vmatpush1.msra.mxu0 0.0
    %281 = vmatprep.subr.mxu0 0.0
    %282 = vmatpush1.msra.mxu0 0.0
    %283 = vmatprep.subr.mxu0 0.0
    %284 = vmatpush1.msra.mxu0 0.0
    %285 = vmatprep.subr.mxu0 0.0
    %286 = vmatpush1.msra.mxu0 0.0
    %287 = vmatprep.subr.mxu0 0.0
    %288 = vmatpush1.msra.mxu0 0.0
    %289 = vmatprep.subr.mxu0 0.0
    %290 = vmatpush1.msra.mxu0 0.0
    %291 = vmatprep.subr.mxu0 0.0
    %292 = vmatpush1.msra.mxu0 0.0
    %293 = vmatprep.subr.mxu0 0.0
    %294 = vmatpush1.msra.mxu0 0.0
    %295 = vmatprep.subr.mxu0 0.0
    %296 = vmatpush1.msra.mxu0 0.0
    %297 = vmatprep.subr.mxu0 0.0
    %298 = vmatpush1.msra.mxu0 0.0
    %299 = vmatprep.subr.mxu0 0.0
    %300 = vmatpush1.msra.mxu0 0.0
    %301 = vmatprep.subr.mxu0 0.0
    %302 = vmatpush1.msra.mxu0 0.0
    %303 = vmatprep.subr.mxu0 0.0
    %304 = vmatpush1.msra.mxu0 0.0
    %305 = vmatprep.subr.mxu0 0.0
    %306 = vmatpush1.msra.mxu0 0.0
    %307 = vmatprep.subr.mxu0 0.0
    %308 = vmatpush1.msra.mxu0 0.0
    %309 = vmatprep.subr.mxu0 0.0
    %310 = vmatpush1.msra.mxu0 0.0
    %311 = vmatprep.mubr.f32.mxu0 0.0
    %312 = vmatmul.mubr.f32.gmra.mrb[0].mxu0 %v225
    %v313 = vpop.f32.mrb[0].mxu0
    %v314 = vadd.f32 %v246, %v313
    %v315 = vpop.f32.mrb[0].mxu0
    %316 = vdwg.mxu0
    %317 = vst [vmem:[#allocation7] sm:$0xff] %v314
    // Predicated region
    $region22: #{tpu_custom_call.1} parent=1 // pred_check
      _
    $region23: #{tpu_custom_call.1} parent=1 // pred_check_branch
      %319 = sbr.rel (0) target = $region25
    $region24: #{tpu_custom_call.1} parent=1 // pred_region
      %s321 = ssub.s32 128, 128
      %322 = vsyncadd [#allocation4], %s321
      %s324 = sshll.u32 [#allocation7], 4
      %s325 = int_to_ptr.vmem [resolvable:$true] %s324
      %327 = dma.vmem_to_hbm [thread:$0]  %s325, 128, %s3, [#allocation4]
    $region25: #{tpu_custom_call.1} parent=1 // pred_fallthru
      _
    // Predicated region
    $region26: #{tpu_custom_call.1} parent=1 // pred_check
      _
    $region27: #{tpu_custom_call.1} parent=1 // pred_check_branch
      %329 = sbr.rel (0) target = $region29
    $region28: #{tpu_custom_call.1} parent=1 // pred_region
      %330 = dma.done [#allocation4], 128
    $region29: #{tpu_custom_call.1} parent=1 // pred_fallthru
      _
    %331 = vsyncpa [#allocation3], 1
    %332 = vsyncpa [#allocation6], 1
    %333 = vsyncpa [#allocation4], 1

</llo_original>
